<compile_context>
chip_gen: v5e
topology: v5e:2x2
jax: 0.10.0
libtpu: 0.0.40
codegen_flags: <defaults>
</compile_context>

<pallas_src>
import functools

import jax
import jax.numpy as jnp
from jax.experimental import pallas as pl
from jax.experimental.pallas import tpu as pltpu

LANE = 128   # lane width / feature padding
TM = 128     # row tile (output nodes)
TK = 128     # reduction tile (neighbor nodes)


def _round_up(x, m):
    return (x + m - 1) // m * m


# ---------------------------------------------------------------------------
# Kernel 1: per-layer projection  XW = X @ W  (bf16 MXU operands, f32 acc)
# ---------------------------------------------------------------------------
def xw_kernel(x_ref, w_ref, o_ref):
    acc = jnp.dot(x_ref[...], w_ref[...], preferred_element_type=jnp.float32)
    o_ref[...] = acc.astype(o_ref.dtype)


def project_xw(x_bf16, w_bf16):
    n_pad, f_in_pad = x_bf16.shape
    f_out_pad = w_bf16.shape[1]
    return pl.pallas_call(
        xw_kernel,
        out_shape=jax.ShapeDtypeStruct((n_pad, f_out_pad), jnp.bfloat16),
        grid_spec=pltpu.PrefetchScalarGridSpec(
            num_scalar_prefetch=0,
            grid=(n_pad // TM,),
            in_specs=[
                pl.BlockSpec((TM, f_in_pad), lambda i: (i, 0)),
                pl.BlockSpec((f_in_pad, f_out_pad), lambda i: (0, 0)),
            ],
            out_specs=pl.BlockSpec((TM, f_out_pad), lambda i: (i, 0)),
        ),
        compiler_params=pltpu.CompilerParams(
            dimension_semantics=("parallel",),
            vmem_limit_bytes=32 * 1024 * 1024,
        ),
        cost_estimate=pl.CostEstimate(
            flops=2 * n_pad * f_in_pad * f_out_pad,
            transcendentals=0,
            bytes_accessed=2 * (n_pad * f_in_pad
                                + f_in_pad * f_out_pad
                                + n_pad * f_out_pad),
        ),
    )(x_bf16, w_bf16)


# ---------------------------------------------------------------------------
# Kernel 2 (fused): A_norm @ XW + b  ->  LayerNorm (masked)  ->  ReLU
# grid = (row tiles, reduction tiles); f32 accumulator; epilogue on last k.
# ---------------------------------------------------------------------------
def gcn_agg_kernel(a_ref, xw_ref, b_ref, gamma_ref, beta_ref, o_ref, acc_ref,
                   *, f_valid):
    k = pl.program_id(1)

    @pl.when(k == 0)
    def _():
        acc_ref[...] = jnp.zeros_like(acc_ref)

    acc_ref[...] += jnp.dot(a_ref[...], xw_ref[...],
                            preferred_element_type=jnp.float32)

    @pl.when(k == pl.num_programs(1) - 1)
    def _():
        h = acc_ref[...] + b_ref[...]
        # Padded feature columns of h are exactly zero (W and b zero-padded),
        # so the row sum over the padded width equals the sum over the valid
        # columns.  Mask only the centered term so the variance is also taken
        # over the valid columns.
        inv_f = 1.0 / f_valid
        mean = jnp.sum(h, axis=-1, keepdims=True) * inv_f
        col = jax.lax.broadcasted_iota(jnp.int32, h.shape, 1)
        mask = (col < f_valid).astype(jnp.float32)
        centered = (h - mean) * mask
        var = jnp.sum(centered * centered, axis=-1, keepdims=True) * inv_f
        hn = centered * jax.lax.rsqrt(var + 1e-5)      # eps = PyTorch default
        hn = hn * gamma_ref[...] + beta_ref[...]
        o_ref[...] = jnp.maximum(hn, 0.0).astype(o_ref.dtype)
        # TODO(synk): nn.Dropout is stochastic in train mode; the eval-mode
        # forward (identity) is what is implemented here.


def gcn_aggregate_norm_relu(a_bf16, xw_bf16, b_pad, gamma_pad, beta_pad,
                            f_valid):
    n_pad = a_bf16.shape[0]
    f_out_pad = xw_bf16.shape[1]
    kernel = functools.partial(gcn_agg_kernel, f_valid=f_valid)
    return pl.pallas_call(
        kernel,
        out_shape=jax.ShapeDtypeStruct((n_pad, f_out_pad), jnp.float32),
        grid_spec=pltpu.PrefetchScalarGridSpec(
            num_scalar_prefetch=0,
            grid=(n_pad // TM, n_pad // TK),
            in_specs=[
                pl.BlockSpec((TM, TK), lambda i, k: (i, k)),            # A
                pl.BlockSpec((TK, f_out_pad), lambda i, k: (k, 0)),     # XW
                pl.BlockSpec((1, f_out_pad), lambda i, k: (0, 0)),      # bias
                pl.BlockSpec((1, f_out_pad), lambda i, k: (0, 0)),      # gamma
                pl.BlockSpec((1, f_out_pad), lambda i, k: (0, 0)),      # beta
            ],
            out_specs=pl.BlockSpec((TM, f_out_pad), lambda i, k: (i, 0)),
            scratch_shapes=[pltpu.VMEM((TM, f_out_pad), jnp.float32)],
        ),
        compiler_params=pltpu.CompilerParams(
            dimension_semantics=("parallel", "arbitrary"),
            vmem_limit_bytes=32 * 1024 * 1024,
        ),
        cost_estimate=pl.CostEstimate(
            flops=2 * n_pad * n_pad * f_out_pad,
            transcendentals=n_pad,
            bytes_accessed=2 * n_pad * n_pad          # bf16 A
                           + 2 * n_pad * f_out_pad    # bf16 XW
                           + 4 * n_pad * f_out_pad,   # f32 out
        ),
    )(a_bf16, xw_bf16, b_pad, gamma_pad, beta_pad)


# ---------------------------------------------------------------------------
# Glue: dense symmetric-normalized adjacency of GCNConv
#   A[dst, src] = 1 for every edge, plus self loops; deg = row sum;
#   A_norm = D^{-1/2} A D^{-1/2}
# TODO(synk): for large/sparse graphs the dense adjacency should be replaced
# by a block-skipped or CSR (scalar-prefetch) formulation.
# ---------------------------------------------------------------------------
def gcn_normalized_adjacency(edge_index, num_nodes):
    src = edge_index[0]
    dst = edge_index[1]
    adj = jnp.zeros((num_nodes, num_nodes), dtype=jnp.float32)
    adj = adj.at[dst, src].add(1.0)
    adj = adj + jnp.eye(num_nodes, dtype=jnp.float32)  # self-loops
    deg = jnp.sum(adj, axis=1)
    d_inv_sqrt = jnp.where(deg > 0, 1.0 / jnp.sqrt(deg), 0.0)
    return adj * d_inv_sqrt[:, None] * d_inv_sqrt[None, :]


# ---------------------------------------------------------------------------
# Gnn parameters matching GnnLayer.init_weights(): eye() conv weights, zero
# bias; LayerNorm gamma=1, beta=0.
# ---------------------------------------------------------------------------
def make_gnn_params(in_features, hidden_features, out_features, layers):
    dims = []
    for layer_idx in range(1, layers + 1):
        if layer_idx == layers and layers == 1:
            dims.append((in_features, out_features))
        elif layer_idx == layers:
            dims.append((hidden_features, out_features))
        elif layer_idx == 1:
            dims.append((in_features, hidden_features))
        else:
            dims.append((hidden_features, hidden_features))

    params = []
    for (di, do) in dims:
        w = jnp.eye(di, do, dtype=jnp.float32)          # torch.nn.init.eye_
        b = jnp.zeros((do,), dtype=jnp.float32)         # zero bias
        gamma = jnp.ones((do,), dtype=jnp.float32)      # LayerNorm weight
        beta = jnp.zeros((do,), dtype=jnp.float32)      # LayerNorm bias
        params.append((w, b, gamma, beta))
    return params


def _pad2(arr, rows, cols):
    out = jnp.zeros((rows, cols), dtype=arr.dtype)
    return out.at[: arr.shape[0], : arr.shape[1]].set(arr)


@functools.partial(jax.jit, static_argnames=("num_nodes",))
def gnn_forward(x, edge_index, params, num_nodes):
    n_pad = _round_up(num_nodes, max(TM, TK))
    a_norm = gcn_normalized_adjacency(edge_index, num_nodes)
    a_bf16 = _pad2(a_norm, n_pad, n_pad).astype(jnp.bfloat16)

    for (w, b, gamma, beta) in params:
        f_in, f_out = w.shape
        f_in_pad = _round_up(f_in, LANE)
        f_out_pad = _round_up(f_out, LANE)

        x_pad = _pad2(x, n_pad, f_in_pad).astype(jnp.bfloat16)
        w_pad = _pad2(w, f_in_pad, f_out_pad).astype(jnp.bfloat16)
        b_pad = _pad2(b[None, :], 1, f_out_pad)
        gamma_pad = _pad2(gamma[None, :], 1, f_out_pad)
        beta_pad = _pad2(beta[None, :], 1, f_out_pad)

        xw = project_xw(x_pad, w_pad)                       # [n_pad, f_out_pad] bf16
        out = gcn_aggregate_norm_relu(a_bf16, xw, b_pad, gamma_pad, beta_pad,
                                      f_valid=f_out)        # [n_pad, f_out_pad] f32
        x = out[:num_nodes, :f_out]                         # strip padding
    return x


# ---------------------------------------------------------------------------
# Pure-JAX reference (f32 throughout) for a correctness check.
# ---------------------------------------------------------------------------
def gnn_forward_ref(x, edge_index, params, num_nodes):
    a_norm = gcn_normalized_adjacency(edge_index, num_nodes)
    for (w, b, gamma, beta) in params:
        h = a_norm @ (x @ w) + b[None, :]
        mean = jnp.mean(h, axis=-1, keepdims=True)
        var = jnp.mean((h - mean) ** 2, axis=-1, keepdims=True)
        hn = (h - mean) * jax.lax.rsqrt(var + 1e-5)
        hn = hn * gamma[None, :] + beta[None, :]
        x = jnp.maximum(hn, 0.0)
    return x


if __name__ == "__main__":
    # Small deterministic problem: 8 nodes, 32 features, 1 GCN layer (defaults).
    N = 8
    IN_FEATURES = 32
    HIDDEN_FEATURES = 32
    OUT_FEATURES = 32
    LAYERS = 1

    key = jax.random.PRNGKey(0)
    x = jax.random.normal(key, (N, IN_FEATURES), dtype=jnp.float32)

    # Directed ring graph (both directions), 2*N edges.
    src = jnp.arange(N, dtype=jnp.int32)
    dst = (src + 1) % N
    edge_index = jnp.concatenate(
        [jnp.stack([src, dst], axis=0), jnp.stack([dst, src], axis=0)], axis=1
    )  # [2, 2*N]

    params = make_gnn_params(IN_FEATURES, HIDDEN_FEATURES, OUT_FEATURES, LAYERS)

    out = gnn_forward(x, edge_index, params, num_nodes=N)
    jax.block_until_ready(out)

    assert out.shape == (N, OUT_FEATURES)
    assert bool(jnp.all(out >= 0.0))            # ReLU output is non-negative
    assert bool(jnp.all(jnp.isfinite(out)))     # LayerNorm masking is sane

    # Compare against the f32 pure-JAX reference (bf16 MXU operands -> loose tol).
    ref = gnn_forward_ref(x, edge_index, params, N)
    max_err = float(jnp.max(jnp.abs(out - ref)))
    assert max_err < 0.1, f"max abs error vs reference = {max_err}"

    print("KERNEL_OK")
</pallas_src>

<mosaic_0001>
module attributes {stable_mosaic.version = 11 : i64} {
  func.func @xw_kernel(%arg0: i32, %arg1: memref<128x128xbf16, #tpu.memory_space<vmem>>, %arg2: memref<128x128xbf16, #tpu.memory_space<vmem>>, %arg3: memref<128x128xbf16, #tpu.memory_space<vmem>>) attributes {dimension_semantics = [#tpu.dimension_semantics<parallel>], iteration_bounds = array<i64: 1>, scalar_prefetch = 0 : i64, scratch_operands = 0 : i64, tpu.core_type = #tpu.core_type<tc>, window_params = [{transform_indices = @transform_0, window_bounds = array<i64: 128, 128>}, {pipeline_mode = #tpu.pipeline_mode<synchronous>, transform_indices = @transform_1, window_bounds = array<i64: 128, 128>}, {transform_indices = @transform_2, window_bounds = array<i64: 128, 128>}]} {
    %c0 = arith.constant 0 : index
    %c0_0 = arith.constant 0 : index
    %0 = vector.load %arg1[%c0, %c0_0] : memref<128x128xbf16, #tpu.memory_space<vmem>>, vector<128x128xbf16>
    %c0_1 = arith.constant 0 : index
    %c0_2 = arith.constant 0 : index
    %1 = vector.load %arg2[%c0_1, %c0_2] : memref<128x128xbf16, #tpu.memory_space<vmem>>, vector<128x128xbf16>
    %cst = arith.constant dense<0.000000e+00> : vector<128x128xf32>
    %2 = tpu.matmul %0, %1, %cst {dimension_numbers = #tpu.dot_dimension_numbers<[1], [0], [0], [1], [0, 0, 1, 1], [], []>} : vector<128x128xbf16>, vector<128x128xbf16>, vector<128x128xf32> -> vector<128x128xf32>
    %3 = arith.truncf %2 : vector<128x128xf32> to vector<128x128xbf16>
    %c0_3 = arith.constant 0 : index
    %c0_4 = arith.constant 0 : index
    %4 = vector.load %arg3[%c0_3, %c0_4] : memref<128x128xbf16, #tpu.memory_space<vmem>>, vector<128x128xbf16>
    tpu.vector_store %arg3[%c0_3, %c0_4], %3 {strides = array<i32>} : memref<128x128xbf16, #tpu.memory_space<vmem>>, vector<128x128xbf16>,
    return
  }
  func.func @transform_0(%arg0: i32) -> (i32, i32) {
    %c0_i32 = arith.constant 0 : i32
    %c0_i32_0 = arith.constant 0 : i32
    return %arg0, %c0_i32 : i32, i32
  }
  func.func @transform_1(%arg0: i32) -> (i32, i32) {
    %c0_i32 = arith.constant 0 : i32
    %c0_i32_0 = arith.constant 0 : i32
    %c0_i32_1 = arith.constant 0 : i32
    return %c0_i32, %c0_i32_0 : i32, i32
  }
  func.func @transform_2(%arg0: i32) -> (i32, i32) {
    %c0_i32 = arith.constant 0 : i32
    %c0_i32_0 = arith.constant 0 : i32
    return %arg0, %c0_i32 : i32, i32
  }
}

module attributes {stable_mosaic.version = 11 : i64} {
  func.func @gcn_agg_kernel(%arg0: i32, %arg1: i32, %arg2: memref<128x128xbf16, #tpu.memory_space<vmem>>, %arg3: memref<128x128xbf16, #tpu.memory_space<vmem>>, %arg4: memref<1x128xf32, #tpu.memory_space<vmem>>, %arg5: memref<1x128xf32, #tpu.memory_space<vmem>>, %arg6: memref<1x128xf32, #tpu.memory_space<vmem>>, %arg7: memref<128x128xf32, #tpu.memory_space<vmem>>, %arg8: memref<128x128xf32, #tpu.memory_space<vmem>>) attributes {dimension_semantics = [#tpu.dimension_semantics<parallel>, #tpu.dimension_semantics<arbitrary>], iteration_bounds = array<i64: 1, 1>, scalar_prefetch = 0 : i64, scratch_operands = 1 : i64, tpu.core_type = #tpu.core_type<tc>, window_params = [{transform_indices = @transform_0, window_bounds = array<i64: 128, 128>}, {transform_indices = @transform_1, window_bounds = array<i64: 128, 128>}, {pipeline_mode = #tpu.pipeline_mode<synchronous>, transform_indices = @transform_2, window_bounds = array<i64: 1, 128>}, {pipeline_mode = #tpu.pipeline_mode<synchronous>, transform_indices = @transform_3, window_bounds = array<i64: 1, 128>}, {pipeline_mode = #tpu.pipeline_mode<synchronous>, transform_indices = @transform_4, window_bounds = array<i64: 1, 128>}, {transform_indices = @transform_5, window_bounds = array<i64: 128, 128>}]} {
    %c0_i32 = arith.constant 0 : i32
    %0 = arith.cmpi eq, %arg1, %c0_i32 : i32
    %1 = arith.extui %0 : i1 to i32
    %c0_i32_0 = arith.constant 0 : i32
    %2 = arith.cmpi ne, %1, %c0_i32_0 : i32
    scf.if %2 {
      %cst_10 = arith.constant 0.000000e+00 : f32
      %12 = vector.broadcast %cst_10 : f32 to vector<128x128xf32>
      %c0_11 = arith.constant 0 : index
      %c0_12 = arith.constant 0 : index
      %13 = vector.load %arg8[%c0_11, %c0_12] : memref<128x128xf32, #tpu.memory_space<vmem>>, vector<128x128xf32>
      tpu.vector_store %arg8[%c0_11, %c0_12], %12 {strides = array<i32>} : memref<128x128xf32, #tpu.memory_space<vmem>>, vector<128x128xf32>,
    } else {
    }
    %c0 = arith.constant 0 : index
    %c0_1 = arith.constant 0 : index
    %3 = vector.load %arg8[%c0, %c0_1] : memref<128x128xf32, #tpu.memory_space<vmem>>, vector<128x128xf32>
    %c0_2 = arith.constant 0 : index
    %c0_3 = arith.constant 0 : index
    %4 = vector.load %arg2[%c0_2, %c0_3] : memref<128x128xbf16, #tpu.memory_space<vmem>>, vector<128x128xbf16>
    %c0_4 = arith.constant 0 : index
    %c0_5 = arith.constant 0 : index
    %5 = vector.load %arg3[%c0_4, %c0_5] : memref<128x128xbf16, #tpu.memory_space<vmem>>, vector<128x128xbf16>
    %cst = arith.constant dense<0.000000e+00> : vector<128x128xf32>
    %6 = tpu.matmul %4, %5, %cst {dimension_numbers = #tpu.dot_dimension_numbers<[1], [0], [0], [1], [0, 0, 1, 1], [], []>} : vector<128x128xbf16>, vector<128x128xbf16>, vector<128x128xf32> -> vector<128x128xf32>
    %7 = arith.addf %3, %6 : vector<128x128xf32>
    %c0_6 = arith.constant 0 : index
    %c0_7 = arith.constant 0 : index
    %8 = vector.load %arg8[%c0_6, %c0_7] : memref<128x128xf32, #tpu.memory_space<vmem>>, vector<128x128xf32>
    tpu.vector_store %arg8[%c0_6, %c0_7], %7 {strides = array<i32>} : memref<128x128xf32, #tpu.memory_space<vmem>>, vector<128x128xf32>,
    %c0_i32_8 = arith.constant 0 : i32
    %9 = arith.cmpi eq, %arg1, %c0_i32_8 : i32
    %10 = arith.extui %9 : i1 to i32
    %c0_i32_9 = arith.constant 0 : i32
    %11 = arith.cmpi ne, %10, %c0_i32_9 : i32
    scf.if %11 {
      %c0_10 = arith.constant 0 : index
      %c0_11 = arith.constant 0 : index
      %12 = vector.load %arg8[%c0_10, %c0_11] : memref<128x128xf32, #tpu.memory_space<vmem>>, vector<128x128xf32>
      %c0_12 = arith.constant 0 : index
      %c0_13 = arith.constant 0 : index
      %13 = vector.load %arg4[%c0_12, %c0_13] : memref<1x128xf32, #tpu.memory_space<vmem>>, vector<1x128xf32>
      %14 = vector.broadcast %13 : vector<1x128xf32> to vector<128x128xf32>
      %15 = arith.addf %12, %14 : vector<128x128xf32>
      %cst_14 = arith.constant dense<0.000000e+00> : vector<128xf32>
      %16 = vector.multi_reduction <add>, %15, %cst_14 [1] : vector<128x128xf32> to vector<128xf32>
      %17 = vector.shape_cast %16 : vector<128xf32> to vector<128x1xf32>
      %cst_15 = arith.constant 3.125000e-02 : f32
      %18 = vector.broadcast %cst_15 : f32 to vector<128x1xf32>
      %19 = arith.mulf %17, %18 : vector<128x1xf32>
      %20 = tpu.iota {dimensions = array<i32: 1>} : vector<128x128xi32>
      %c32_i32 = arith.constant 32 : i32
      %21 = vector.broadcast %c32_i32 : i32 to vector<128x128xi32>
      %22 = arith.cmpi slt, %20, %21 : vector<128x128xi32>
      %23 = arith.extui %22 : vector<128x128xi1> to vector<128x128xi32>
      %24 = arith.sitofp %23 : vector<128x128xi32> to vector<128x128xf32>
      %25 = vector.broadcast %19 : vector<128x1xf32> to vector<128x128xf32>
      %26 = arith.subf %15, %25 : vector<128x128xf32>
      %27 = arith.mulf %26, %24 : vector<128x128xf32>
      %28 = arith.mulf %27, %27 : vector<128x128xf32>
      %cst_16 = arith.constant dense<0.000000e+00> : vector<128xf32>
      %29 = vector.multi_reduction <add>, %28, %cst_16 [1] : vector<128x128xf32> to vector<128xf32>
      %30 = vector.shape_cast %29 : vector<128xf32> to vector<128x1xf32>
      %cst_17 = arith.constant 3.125000e-02 : f32
      %31 = vector.broadcast %cst_17 : f32 to vector<128x1xf32>
      %32 = arith.mulf %30, %31 : vector<128x1xf32>
      %cst_18 = arith.constant 9.99999974E-6 : f32
      %33 = vector.broadcast %cst_18 : f32 to vector<128x1xf32>
      %34 = arith.addf %32, %33 : vector<128x1xf32>
      %35 = math.rsqrt %34 : vector<128x1xf32>
      %36 = vector.broadcast %35 : vector<128x1xf32> to vector<128x128xf32>
      %37 = arith.mulf %27, %36 : vector<128x128xf32>
      %c0_19 = arith.constant 0 : index
      %c0_20 = arith.constant 0 : index
      %38 = vector.load %arg5[%c0_19, %c0_20] : memref<1x128xf32, #tpu.memory_space<vmem>>, vector<1x128xf32>
      %39 = vector.broadcast %38 : vector<1x128xf32> to vector<128x128xf32>
      %40 = arith.mulf %37, %39 : vector<128x128xf32>
      %c0_21 = arith.constant 0 : index
      %c0_22 = arith.constant 0 : index
      %41 = vector.load %arg6[%c0_21, %c0_22] : memref<1x128xf32, #tpu.memory_space<vmem>>, vector<1x128xf32>
      %42 = vector.broadcast %41 : vector<1x128xf32> to vector<128x128xf32>
      %43 = arith.addf %40, %42 : vector<128x128xf32>
      %cst_23 = arith.constant 0.000000e+00 : f32
      %44 = vector.broadcast %cst_23 : f32 to vector<128x128xf32>
      %45 = arith.maximumf %43, %44 : vector<128x128xf32>
      %c0_24 = arith.constant 0 : index
      %c0_25 = arith.constant 0 : index
      %46 = vector.load %arg7[%c0_24, %c0_25] : memref<128x128xf32, #tpu.memory_space<vmem>>, vector<128x128xf32>
      tpu.vector_store %arg7[%c0_24, %c0_25], %45 {strides = array<i32>} : memref<128x128xf32, #tpu.memory_space<vmem>>, vector<128x128xf32>,
    } else {
    }
    return
  }
  func.func @transform_0(%arg0: i32, %arg1: i32) -> (i32, i32) {
    %c0_i32 = arith.constant 0 : i32
    return %arg0, %arg1 : i32, i32
  }
  func.func @transform_1(%arg0: i32, %arg1: i32) -> (i32, i32) {
    %c0_i32 = arith.constant 0 : i32
    %c0_i32_0 = arith.constant 0 : i32
    return %arg1, %c0_i32 : i32, i32
  }
  func.func @transform_2(%arg0: i32, %arg1: i32) -> (i32, i32) {
    %c0_i32 = arith.constant 0 : i32
    %c0_i32_0 = arith.constant 0 : i32
    %c0_i32_1 = arith.constant 0 : i32
    return %c0_i32, %c0_i32_0 : i32, i32
  }
  func.func @transform_3(%arg0: i32, %arg1: i32) -> (i32, i32) {
    %c0_i32 = arith.constant 0 : i32
    %c0_i32_0 = arith.constant 0 : i32
    %c0_i32_1 = arith.constant 0 : i32
    return %c0_i32, %c0_i32_0 : i32, i32
  }
  func.func @transform_4(%arg0: i32, %arg1: i32) -> (i32, i32) {
    %c0_i32 = arith.constant 0 : i32
    %c0_i32_0 = arith.constant 0 : i32
    %c0_i32_1 = arith.constant 0 : i32
    return %c0_i32, %c0_i32_0 : i32, i32
  }
  func.func @transform_5(%arg0: i32, %arg1: i32) -> (i32, i32) {
    %c0_i32 = arith.constant 0 : i32
    %c0_i32_0 = arith.constant 0 : i32
    return %arg0, %c0_i32 : i32, i32
  }
}

</mosaic_0001>

<llo_original>
// kernel: gnn_forward.2
$region0: #{gnn_forward.2}
  #allocation0 [shape = 'u32[]', space=smem, size = 0x4, offset = 0x4, fixed_abs, tag = 'smem constant byte address 0x4 - core index']
  #allocation1 [shape = 'u32[72,128]{1,0:T(1,128)}', space=vmem, size = 0x9000, scoped, tag = 'internal scratch']
  %s0 = inlined_call_operand.vmem [shape: bf16[128,128], index: 0, kind: input, shape index: {}]
  %s1 = inlined_call_operand.vmem [shape: bf16[128,128], index: 1, kind: input, shape index: {}]
  %s2 = inlined_call_operand.vmem [shape: bf16[128,128], index: 2, kind: output, shape index: {}]
  %s3 = sld [smem:[#allocation0]]
  $region18: #{gnn_forward.2} parent=0
    _
  %s5 = ssub.s32 1, %s3
  %s6 = scalar_select 0, %s5, %s3
  // Predicated region
  $region2: #{gnn_forward.2} parent=0 // pred_check
    _
  $region3: #{gnn_forward.2} parent=0 // pred_check_branch
    %8 = sbr.rel (0) target = $region5
  $region4: #{gnn_forward.2} parent=0 // pred_region
    _
  $region5: #{gnn_forward.2} parent=0 // pred_fallthru
    _
  // Predicated region
  $region6: #{gnn_forward.2} parent=0 // pred_check
    _
  $region7: #{gnn_forward.2} parent=0 // pred_check_branch
    %10 = sbr.rel (0) target = $region9
  $region8: #{gnn_forward.2} parent=0 // pred_region
    _
  $region9: #{gnn_forward.2} parent=0 // pred_fallthru
    _
  %v11 = vld [vmem:[%s0] sm:$0xf]
  %v12 = vld [vmem:[%s0 + $0x4] sm:$0xf]
  %v13 = vld [vmem:[%s0 + $0x8] sm:$0xf]
  %v14 = vld [vmem:[%s0 + $0xc] sm:$0xf]
  %v15 = vld [vmem:[%s0 + $0x10] sm:$0xf]
  %v16 = vld [vmem:[%s0 + $0x14] sm:$0xf]
  %v17 = vld [vmem:[%s0 + $0x18] sm:$0xf]
  %v18 = vld [vmem:[%s0 + $0x1c] sm:$0xf]
  %v19 = vld [vmem:[%s0 + $0x20] sm:$0xf]
  %v20 = vld [vmem:[%s0 + $0x24] sm:$0xf]
  %v21 = vld [vmem:[%s0 + $0x28] sm:$0xf]
  %v22 = vld [vmem:[%s0 + $0x2c] sm:$0xf]
  %v23 = vld [vmem:[%s0 + $0x30] sm:$0xf]
  %v24 = vld [vmem:[%s0 + $0x34] sm:$0xf]
  %v25 = vld [vmem:[%s0 + $0x38] sm:$0xf]
  %v26 = vld [vmem:[%s0 + $0x3c] sm:$0xf]
  %v27 = vld [vmem:[%s1] sm:$0xf]
  %v28 = vld [vmem:[%s1 + $0x4] sm:$0xf]
  %v29 = vld [vmem:[%s1 + $0x8] sm:$0xf]
  %v30 = vld [vmem:[%s1 + $0xc] sm:$0xf]
  %v31 = vld [vmem:[%s1 + $0x10] sm:$0xf]
  %v32 = vld [vmem:[%s1 + $0x14] sm:$0xf]
  %v33 = vld [vmem:[%s1 + $0x18] sm:$0xf]
  %v34 = vld [vmem:[%s1 + $0x1c] sm:$0xf]
  %v35 = vld [vmem:[%s1 + $0x20] sm:$0xf]
  %v36 = vld [vmem:[%s1 + $0x24] sm:$0xf]
  %v37 = vld [vmem:[%s1 + $0x28] sm:$0xf]
  %v38 = vld [vmem:[%s1 + $0x2c] sm:$0xf]
  %v39 = vld [vmem:[%s1 + $0x30] sm:$0xf]
  %v40 = vld [vmem:[%s1 + $0x34] sm:$0xf]
  %v41 = vld [vmem:[%s1 + $0x38] sm:$0xf]
  %v42 = vld [vmem:[%s1 + $0x3c] sm:$0xf]
  %v59 = vunpack.c.l.b16 %v11
  %v60 = vunpack.c.l.b16 %v12
  %v61 = vunpack.c.l.b16 %v13
  %v62 = vunpack.c.l.b16 %v14
  %v63 = vunpack.c.l.b16 %v15
  %v64 = vunpack.c.l.b16 %v16
  %v65 = vunpack.c.l.b16 %v17
  %v66 = vunpack.c.l.b16 %v18
  %v67 = vunpack.c.l.b16 %v19
  %v68 = vunpack.c.l.b16 %v20
  %v69 = vunpack.c.l.b16 %v21
  %v70 = vunpack.c.l.b16 %v22
  %v71 = vunpack.c.l.b16 %v23
  %v72 = vunpack.c.l.b16 %v24
  %v73 = vunpack.c.l.b16 %v25
  %v74 = vunpack.c.l.b16 %v26
  %v75 = vpack.c.b16 %v60, %v59
  %v76 = vpack.c.b16 %v62, %v61
  %v77 = vpack.c.b16 %v64, %v63
  %v78 = vpack.c.b16 %v66, %v65
  %v79 = vpack.c.b16 %v68, %v67
  %v80 = vpack.c.b16 %v70, %v69
  %v81 = vpack.c.b16 %v72, %v71
  %v82 = vpack.c.b16 %v74, %v73
  %v107 = vunpack.c.l.b16 %v27
  %v108 = vunpack.c.l.b16 %v28
  %v109 = vunpack.c.l.b16 %v29
  %v110 = vunpack.c.l.b16 %v30
  %v111 = vunpack.c.l.b16 %v31
  %v112 = vunpack.c.l.b16 %v32
  %v113 = vunpack.c.l.b16 %v33
  %v114 = vunpack.c.l.b16 %v34
  %v115 = vunpack.c.l.b16 %v35
  %v116 = vunpack.c.l.b16 %v36
  %v117 = vunpack.c.l.b16 %v37
  %v118 = vunpack.c.l.b16 %v38
  %v119 = vunpack.c.l.b16 %v39
  %v120 = vunpack.c.l.b16 %v40
  %v121 = vunpack.c.l.b16 %v41
  %v122 = vunpack.c.l.b16 %v42
  %v123 = vpack.c.b16 %v108, %v107
  %v124 = vpack.c.b16 %v110, %v109
  %v125 = vpack.c.b16 %v112, %v111
  %v126 = vpack.c.b16 %v114, %v113
  %v127 = vpack.c.b16 %v116, %v115
  %v128 = vpack.c.b16 %v118, %v117
  %v129 = vpack.c.b16 %v120, %v119
  %v130 = vpack.c.b16 %v122, %v121
  %139 = vmatpush.bf16.msra.mxu0 %v130
  %140 = vmatpush.bf16.msra.mxu0 %v129
  %141 = vmatpush.bf16.msra.mxu0 %v128
  %142 = vmatpush.bf16.msra.mxu0 %v127
  %143 = vmatpush.bf16.msra.mxu0 %v126
  %144 = vmatpush.bf16.msra.mxu0 %v125
  %145 = vmatpush.bf16.msra.mxu0 %v124
  %146 = vmatpush.bf16.msra.mxu0 %v123
  %147 = vmatmul.bf16.gmra.mxu0 %v75
  %v148 = vpop.f32.mrf.mxu0
  %v149 = vadd.f32 0.0, %v148
  %v150 = vpop.f32.mrf.mxu0
  %v151 = vadd.f32 0.0, %v150
  %152 = vmatmul.bf16.gmra.mxu0 %v76
  %v153 = vpop.f32.mrf.mxu0
  %v154 = vadd.f32 0.0, %v153
  %v155 = vpop.f32.mrf.mxu0
  %v156 = vadd.f32 0.0, %v155
  %157 = vmatmul.bf16.gmra.mxu0 %v77
  %v158 = vpop.f32.mrf.mxu0
  %v159 = vadd.f32 0.0, %v158
  %v160 = vpop.f32.mrf.mxu0
  %v161 = vadd.f32 0.0, %v160
  %162 = vmatmul.bf16.gmra.mxu0 %v78
  %v163 = vpop.f32.mrf.mxu0
  %v164 = vadd.f32 0.0, %v163
  %v165 = vpop.f32.mrf.mxu0
  %v166 = vadd.f32 0.0, %v165
  %167 = vmatmul.bf16.gmra.mxu0 %v79
  %v168 = vpop.f32.mrf.mxu0
  %v169 = vadd.f32 0.0, %v168
  %v170 = vpop.f32.mrf.mxu0
  %v171 = vadd.f32 0.0, %v170
  %172 = vmatmul.bf16.gmra.mxu0 %v80
  %v173 = vpop.f32.mrf.mxu0
  %v174 = vadd.f32 0.0, %v173
  %v175 = vpop.f32.mrf.mxu0
  %v176 = vadd.f32 0.0, %v175
  %177 = vmatmul.bf16.gmra.mxu0 %v81
  %v178 = vpop.f32.mrf.mxu0
  %v179 = vadd.f32 0.0, %v178
  %v180 = vpop.f32.mrf.mxu0
  %v181 = vadd.f32 0.0, %v180
  %182 = vmatmul.bf16.gmra.mxu0 %v82
  %v183 = vpop.f32.mrf.mxu0
  %v184 = vadd.f32 0.0, %v183
  %v185 = vpop.f32.mrf.mxu0
  %v186 = vadd.f32 0.0, %v185
  %187 = vdwg.mxu0
  %v188 = vpack.c.bf16 %v149, %v149
  %v189 = vpack.c.bf16 %v151, %v151
  %v190 = vpack.c.bf16 %v154, %v154
  %v191 = vpack.c.bf16 %v156, %v156
  %v192 = vpack.c.bf16 %v159, %v159
  %v193 = vpack.c.bf16 %v161, %v161
  %v194 = vpack.c.bf16 %v164, %v164
  %v195 = vpack.c.bf16 %v166, %v166
  %v196 = vpack.c.bf16 %v169, %v169
  %v197 = vpack.c.bf16 %v171, %v171
  %v198 = vpack.c.bf16 %v174, %v174
  %v199 = vpack.c.bf16 %v176, %v176
  %v200 = vpack.c.bf16 %v179, %v179
  %v201 = vpack.c.bf16 %v181, %v181
  %v202 = vpack.c.bf16 %v184, %v184
  %v203 = vpack.c.bf16 %v186, %v186
  %204 = vst [vmem:[%s2] sm:$0xf] %v188
  %205 = vst [vmem:[%s2 + $0x4] sm:$0xf] %v189
  %206 = vst [vmem:[%s2 + $0x8] sm:$0xf] %v190
  %207 = vst [vmem:[%s2 + $0xc] sm:$0xf] %v191
  %208 = vst [vmem:[%s2 + $0x10] sm:$0xf] %v192
  %209 = vst [vmem:[%s2 + $0x14] sm:$0xf] %v193
  %210 = vst [vmem:[%s2 + $0x18] sm:$0xf] %v194
  %211 = vst [vmem:[%s2 + $0x1c] sm:$0xf] %v195
  %212 = vst [vmem:[%s2 + $0x20] sm:$0xf] %v196
  %213 = vst [vmem:[%s2 + $0x24] sm:$0xf] %v197
  %214 = vst [vmem:[%s2 + $0x28] sm:$0xf] %v198
  %215 = vst [vmem:[%s2 + $0x2c] sm:$0xf] %v199
  %216 = vst [vmem:[%s2 + $0x30] sm:$0xf] %v200
  %217 = vst [vmem:[%s2 + $0x34] sm:$0xf] %v201
  %218 = vst [vmem:[%s2 + $0x38] sm:$0xf] %v202
  %219 = vst [vmem:[%s2 + $0x3c] sm:$0xf] %v203
  // Predicated region
  $region10: #{gnn_forward.2} parent=0 // pred_check
    _
  $region11: #{gnn_forward.2} parent=0 // pred_check_branch
    %221 = sbr.rel (0) target = $region13
  $region12: #{gnn_forward.2} parent=0 // pred_region
    _
  $region13: #{gnn_forward.2} parent=0 // pred_fallthru
    _
  // Predicated region
  $region14: #{gnn_forward.2} parent=0 // pred_check
    _
  $region15: #{gnn_forward.2} parent=0 // pred_check_branch
    %223 = sbr.rel (0) target = $region17
  $region16: #{gnn_forward.2} parent=0 // pred_region
    _
  $region17: #{gnn_forward.2} parent=0 // pred_fallthru
    _

// kernel: gnn_forward.3
$region0: #{gnn_forward.3}
  #allocation0 [shape = 'u32[]', space=smem, size = 0x4, offset = 0x4, fixed_abs, tag = 'smem constant byte address 0x4 - core index']
  #allocation1 [shape = 'u32[72,128]{1,0:T(1,128)}', space=vmem, size = 0x9000, scoped, tag = 'internal scratch']
  #allocation2 [shape = 'f32[128,128]{1,0:T(8,128)}', space=vmem, size = 0x10000, scoped, tag = 'scratch operand']
  %s0 = inlined_call_operand.vmem [shape: bf16[128,128], index: 0, kind: input, shape index: {}]
  %s1 = inlined_call_operand.vmem [shape: bf16[128,128], index: 1, kind: input, shape index: {}]
  %s2 = inlined_call_operand.vmem [shape: f32[1,128], index: 2, kind: input, shape index: {}]
  %s3 = inlined_call_operand.vmem [shape: f32[1,128], index: 3, kind: input, shape index: {}]
  %s4 = inlined_call_operand.vmem [shape: f32[1,128], index: 4, kind: input, shape index: {}]
  %s5 = inlined_call_operand.vmem [shape: f32[128,128], index: 5, kind: output, shape index: {}]
  %s6 = sld [smem:[#allocation0]]
  $region38: #{gnn_forward.3} parent=0
    _
  %s8 = ssub.s32 1, %s6
  %s9 = scalar_select 0, %s8, %s6
  // Predicated region
  $region2: #{gnn_forward.3} parent=0 // pred_check
    _
  $region3: #{gnn_forward.3} parent=0 // pred_check_branch
    %11 = sbr.rel (0) target = $region5
  $region4: #{gnn_forward.3} parent=0 // pred_region
    _
  $region5: #{gnn_forward.3} parent=0 // pred_fallthru
    _
  // Predicated region
  $region6: #{gnn_forward.3} parent=0 // pred_check
    _
  $region7: #{gnn_forward.3} parent=0 // pred_check_branch
    %13 = sbr.rel (0) target = $region9
  $region8: #{gnn_forward.3} parent=0 // pred_region
    _
  $region9: #{gnn_forward.3} parent=0 // pred_fallthru
    _
  // Predicated region
  $region10: #{gnn_forward.3} parent=0 // pred_check
    _
  $region11: #{gnn_forward.3} parent=0 // pred_check_branch
    %15 = sbr.rel (0) target = $region13
  $region12: #{gnn_forward.3} parent=0 // pred_region
    _
  $region13: #{gnn_forward.3} parent=0 // pred_fallthru
    _
  // Predicated region
  $region14: #{gnn_forward.3} parent=0 // pred_check
    _
  $region15: #{gnn_forward.3} parent=0 // pred_check_branch
    %17 = sbr.rel (0) target = $region17
  $region16: #{gnn_forward.3} parent=0 // pred_region
    _
  $region17: #{gnn_forward.3} parent=0 // pred_fallthru
    _
  // Predicated region
  $region18: #{gnn_forward.3} parent=0 // pred_check
    _
  $region19: #{gnn_forward.3} parent=0 // pred_check_branch
    %19 = sbr.rel (0) target = $region21
  $region20: #{gnn_forward.3} parent=0 // pred_region
    _
  $region21: #{gnn_forward.3} parent=0 // pred_fallthru
    _
  %p20 = scmp.eq.s32.totalorder 0, 0
  // Predicated region
  $region22: #{gnn_forward.3} parent=0 // pred_check
    %p21 = pneg %p20
  $region23: #{gnn_forward.3} parent=0 // pred_check_branch
    %23 = sbr.rel (%p21) target = $region25
  $region24: #{gnn_forward.3} parent=0 // pred_region
    %24 = vst [vmem:[#allocation2] sm:$0xff] 0.0
    %25 = vst [vmem:[#allocation2 + $0x8] sm:$0xff] 0.0
    %26 = vst [vmem:[#allocation2 + $0x10] sm:$0xff] 0.0
    %27 = vst [vmem:[#allocation2 + $0x18] sm:$0xff] 0.0
    %28 = vst [vmem:[#allocation2 + $0x20] sm:$0xff] 0.0
    %29 = vst [vmem:[#allocation2 + $0x28] sm:$0xff] 0.0
    %30 = vst [vmem:[#allocation2 + $0x30] sm:$0xff] 0.0
    %31 = vst [vmem:[#allocation2 + $0x38] sm:$0xff] 0.0
    %32 = vst [vmem:[#allocation2 + $0x40] sm:$0xff] 0.0
    %33 = vst [vmem:[#allocation2 + $0x48] sm:$0xff] 0.0
    %34 = vst [vmem:[#allocation2 + $0x50] sm:$0xff] 0.0
    %35 = vst [vmem:[#allocation2 + $0x58] sm:$0xff] 0.0
    %36 = vst [vmem:[#allocation2 + $0x60] sm:$0xff] 0.0
    %37 = vst [vmem:[#allocation2 + $0x68] sm:$0xff] 0.0
    %38 = vst [vmem:[#allocation2 + $0x70] sm:$0xff] 0.0
    %39 = vst [vmem:[#allocation2 + $0x78] sm:$0xff] 0.0
  $region25: #{gnn_forward.3} parent=0 // pred_fallthru
    _
  %v40 = vld [vmem:[#allocation2] sm:$0xff]
  %v41 = vld [vmem:[#allocation2 + $0x8] sm:$0xff]
  %v42 = vld [vmem:[#allocation2 + $0x10] sm:$0xff]
  %v43 = vld [vmem:[#allocation2 + $0x18] sm:$0xff]
  %v44 = vld [vmem:[#allocation2 + $0x20] sm:$0xff]
  %v45 = vld [vmem:[#allocation2 + $0x28] sm:$0xff]
  %v46 = vld [vmem:[#allocation2 + $0x30] sm:$0xff]
  %v47 = vld [vmem:[#allocation2 + $0x38] sm:$0xff]
  %v48 = vld [vmem:[#allocation2 + $0x40] sm:$0xff]
  %v49 = vld [vmem:[#allocation2 + $0x48] sm:$0xff]
  %v50 = vld [vmem:[#allocation2 + $0x50] sm:$0xff]
  %v51 = vld [vmem:[#allocation2 + $0x58] sm:$0xff]
  %v52 = vld [vmem:[#allocation2 + $0x60] sm:$0xff]
  %v53 = vld [vmem:[#allocation2 + $0x68] sm:$0xff]
  %v54 = vld [vmem:[#allocation2 + $0x70] sm:$0xff]
  %v55 = vld [vmem:[#allocation2 + $0x78] sm:$0xff]
  %v56 = vld [vmem:[%s0] sm:$0xf]
  %v57 = vld [vmem:[%s0 + $0x4] sm:$0xf]
  %v58 = vld [vmem:[%s0 + $0x8] sm:$0xf]
  %v59 = vld [vmem:[%s0 + $0xc] sm:$0xf]
  %v60 = vld [vmem:[%s0 + $0x10] sm:$0xf]
  %v61 = vld [vmem:[%s0 + $0x14] sm:$0xf]
  %v62 = vld [vmem:[%s0 + $0x18] sm:$0xf]
  %v63 = vld [vmem:[%s0 + $0x1c] sm:$0xf]
  %v64 = vld [vmem:[%s0 + $0x20] sm:$0xf]
  %v65 = vld [vmem:[%s0 + $0x24] sm:$0xf]
  %v66 = vld [vmem:[%s0 + $0x28] sm:$0xf]
  %v67 = vld [vmem:[%s0 + $0x2c] sm:$0xf]
  %v68 = vld [vmem:[%s0 + $0x30] sm:$0xf]
  %v69 = vld [vmem:[%s0 + $0x34] sm:$0xf]
  %v70 = vld [vmem:[%s0 + $0x38] sm:$0xf]
  %v71 = vld [vmem:[%s0 + $0x3c] sm:$0xf]
  %v72 = vld [vmem:[%s1] sm:$0xf]
  %v73 = vld [vmem:[%s1 + $0x4] sm:$0xf]
  %v74 = vld [vmem:[%s1 + $0x8] sm:$0xf]
  %v75 = vld [vmem:[%s1 + $0xc] sm:$0xf]
  %v76 = vld [vmem:[%s1 + $0x10] sm:$0xf]
  %v77 = vld [vmem:[%s1 + $0x14] sm:$0xf]
  %v78 = vld [vmem:[%s1 + $0x18] sm:$0xf]
  %v79 = vld [vmem:[%s1 + $0x1c] sm:$0xf]
  %v80 = vld [vmem:[%s1 + $0x20] sm:$0xf]
  %v81 = vld [vmem:[%s1 + $0x24] sm:$0xf]
  %v82 = vld [vmem:[%s1 + $0x28] sm:$0xf]
  %v83 = vld [vmem:[%s1 + $0x2c] sm:$0xf]
  %v84 = vld [vmem:[%s1 + $0x30] sm:$0xf]
  %v85 = vld [vmem:[%s1 + $0x34] sm:$0xf]
  %v86 = vld [vmem:[%s1 + $0x38] sm:$0xf]
  %v87 = vld [vmem:[%s1 + $0x3c] sm:$0xf]
  %v104 = vunpack.c.l.b16 %v56
  %v105 = vunpack.c.l.b16 %v57
  %v106 = vunpack.c.l.b16 %v58
  %v107 = vunpack.c.l.b16 %v59
  %v108 = vunpack.c.l.b16 %v60
  %v109 = vunpack.c.l.b16 %v61
  %v110 = vunpack.c.l.b16 %v62
  %v111 = vunpack.c.l.b16 %v63
  %v112 = vunpack.c.l.b16 %v64
  %v113 = vunpack.c.l.b16 %v65
  %v114 = vunpack.c.l.b16 %v66
  %v115 = vunpack.c.l.b16 %v67
  %v116 = vunpack.c.l.b16 %v68
  %v117 = vunpack.c.l.b16 %v69
  %v118 = vunpack.c.l.b16 %v70
  %v119 = vunpack.c.l.b16 %v71
  %v120 = vpack.c.b16 %v105, %v104
  %v121 = vpack.c.b16 %v107, %v106
  %v122 = vpack.c.b16 %v109, %v108
  %v123 = vpack.c.b16 %v111, %v110
  %v124 = vpack.c.b16 %v113, %v112
  %v125 = vpack.c.b16 %v115, %v114
  %v126 = vpack.c.b16 %v117, %v116
  %v127 = vpack.c.b16 %v119, %v118
  %v152 = vunpack.c.l.b16 %v72
  %v153 = vunpack.c.l.b16 %v73
  %v154 = vunpack.c.l.b16 %v74
  %v155 = vunpack.c.l.b16 %v75
  %v156 = vunpack.c.l.b16 %v76
  %v157 = vunpack.c.l.b16 %v77
  %v158 = vunpack.c.l.b16 %v78
  %v159 = vunpack.c.l.b16 %v79
  %v160 = vunpack.c.l.b16 %v80
  %v161 = vunpack.c.l.b16 %v81
  %v162 = vunpack.c.l.b16 %v82
  %v163 = vunpack.c.l.b16 %v83
  %v164 = vunpack.c.l.b16 %v84
  %v165 = vunpack.c.l.b16 %v85
  %v166 = vunpack.c.l.b16 %v86
  %v167 = vunpack.c.l.b16 %v87
  %v168 = vpack.c.b16 %v153, %v152
  %v169 = vpack.c.b16 %v155, %v154
  %v170 = vpack.c.b16 %v157, %v156
  %v171 = vpack.c.b16 %v159, %v158
  %v172 = vpack.c.b16 %v161, %v160
  %v173 = vpack.c.b16 %v163, %v162
  %v174 = vpack.c.b16 %v165, %v164
  %v175 = vpack.c.b16 %v167, %v166
  %184 = vmatpush.bf16.msra.mxu0 %v175
  %185 = vmatpush.bf16.msra.mxu0 %v174
  %186 = vmatpush.bf16.msra.mxu0 %v173
  %187 = vmatpush.bf16.msra.mxu0 %v172
  %188 = vmatpush.bf16.msra.mxu0 %v171
  %189 = vmatpush.bf16.msra.mxu0 %v170
  %190 = vmatpush.bf16.msra.mxu0 %v169
  %191 = vmatpush.bf16.msra.mxu0 %v168
  %192 = vmatmul.bf16.gmra.mxu0 %v120
  %v193 = vpop.f32.mrf.mxu0
  %v194 = vadd.f32 0.0, %v193
  %v195 = vpop.f32.mrf.mxu0
  %v196 = vadd.f32 0.0, %v195
  %197 = vmatmul.bf16.gmra.mxu0 %v121
  %v198 = vpop.f32.mrf.mxu0
  %v199 = vadd.f32 0.0, %v198
  %v200 = vpop.f32.mrf.mxu0
  %v201 = vadd.f32 0.0, %v200
  %202 = vmatmul.bf16.gmra.mxu0 %v122
  %v203 = vpop.f32.mrf.mxu0
  %v204 = vadd.f32 0.0, %v203
  %v205 = vpop.f32.mrf.mxu0
  %v206 = vadd.f32 0.0, %v205
  %207 = vmatmul.bf16.gmra.mxu0 %v123
  %v208 = vpop.f32.mrf.mxu0
  %v209 = vadd.f32 0.0, %v208
  %v210 = vpop.f32.mrf.mxu0
  %v211 = vadd.f32 0.0, %v210
  %212 = vmatmul.bf16.gmra.mxu0 %v124
  %v213 = vpop.f32.mrf.mxu0
  %v214 = vadd.f32 0.0, %v213
  %v215 = vpop.f32.mrf.mxu0
  %v216 = vadd.f32 0.0, %v215
  %217 = vmatmul.bf16.gmra.mxu0 %v125
  %v218 = vpop.f32.mrf.mxu0
  %v219 = vadd.f32 0.0, %v218
  %v220 = vpop.f32.mrf.mxu0
  %v221 = vadd.f32 0.0, %v220
  %222 = vmatmul.bf16.gmra.mxu0 %v126
  %v223 = vpop.f32.mrf.mxu0
  %v224 = vadd.f32 0.0, %v223
  %v225 = vpop.f32.mrf.mxu0
  %v226 = vadd.f32 0.0, %v225
  %227 = vmatmul.bf16.gmra.mxu0 %v127
  %v228 = vpop.f32.mrf.mxu0
  %v229 = vadd.f32 0.0, %v228
  %v230 = vpop.f32.mrf.mxu0
  %v231 = vadd.f32 0.0, %v230
  %232 = vdwg.mxu0
  %v233 = vadd.f32 %v40, %v194
  %v234 = vadd.f32 %v41, %v196
  %v235 = vadd.f32 %v42, %v199
  %v236 = vadd.f32 %v43, %v201
  %v237 = vadd.f32 %v44, %v204
  %v238 = vadd.f32 %v45, %v206
  %v239 = vadd.f32 %v46, %v209
  %v240 = vadd.f32 %v47, %v211
  %v241 = vadd.f32 %v48, %v214
  %v242 = vadd.f32 %v49, %v216
  %v243 = vadd.f32 %v50, %v219
  %v244 = vadd.f32 %v51, %v221
  %v245 = vadd.f32 %v52, %v224
  %v246 = vadd.f32 %v53, %v226
  %v247 = vadd.f32 %v54, %v229
  %v248 = vadd.f32 %v55, %v231
  %249 = vst [vmem:[#allocation2] sm:$0xff] %v233
  %250 = vst [vmem:[#allocation2 + $0x8] sm:$0xff] %v234
  %251 = vst [vmem:[#allocation2 + $0x10] sm:$0xff] %v235
  %252 = vst [vmem:[#allocation2 + $0x18] sm:$0xff] %v236
  %253 = vst [vmem:[#allocation2 + $0x20] sm:$0xff] %v237
  %254 = vst [vmem:[#allocation2 + $0x28] sm:$0xff] %v238
  %255 = vst [vmem:[#allocation2 + $0x30] sm:$0xff] %v239
  %256 = vst [vmem:[#allocation2 + $0x38] sm:$0xff] %v240
  %257 = vst [vmem:[#allocation2 + $0x40] sm:$0xff] %v241
  %258 = vst [vmem:[#allocation2 + $0x48] sm:$0xff] %v242
  %259 = vst [vmem:[#allocation2 + $0x50] sm:$0xff] %v243
  %260 = vst [vmem:[#allocation2 + $0x58] sm:$0xff] %v244
  %261 = vst [vmem:[#allocation2 + $0x60] sm:$0xff] %v245
  %262 = vst [vmem:[#allocation2 + $0x68] sm:$0xff] %v246
  %263 = vst [vmem:[#allocation2 + $0x70] sm:$0xff] %v247
  %264 = vst [vmem:[#allocation2 + $0x78] sm:$0xff] %v248
  // Predicated region
  $region26: #{gnn_forward.3} parent=0 // pred_check
    %p265 = pneg %p20
  $region27: #{gnn_forward.3} parent=0 // pred_check_branch
    %267 = sbr.rel (%p265) target = $region29
  $region28: #{gnn_forward.3} parent=0 // pred_region
    %v268 = vld [vmem:[#allocation2] sm:$0xff]
    %v269 = vld [vmem:[#allocation2 + $0x8] sm:$0xff]
    %v270 = vld [vmem:[#allocation2 + $0x10] sm:$0xff]
    %v271 = vld [vmem:[#allocation2 + $0x18] sm:$0xff]
    %v272 = vld [vmem:[#allocation2 + $0x20] sm:$0xff]
    %v273 = vld [vmem:[#allocation2 + $0x28] sm:$0xff]
    %v274 = vld [vmem:[#allocation2 + $0x30] sm:$0xff]
    %v275 = vld [vmem:[#allocation2 + $0x38] sm:$0xff]
    %v276 = vld [vmem:[#allocation2 + $0x40] sm:$0xff]
    %v277 = vld [vmem:[#allocation2 + $0x48] sm:$0xff]
    %v278 = vld [vmem:[#allocation2 + $0x50] sm:$0xff]
    %v279 = vld [vmem:[#allocation2 + $0x58] sm:$0xff]
    %v280 = vld [vmem:[#allocation2 + $0x60] sm:$0xff]
    %v281 = vld [vmem:[#allocation2 + $0x68] sm:$0xff]
    %v282 = vld [vmem:[#allocation2 + $0x70] sm:$0xff]
    %v283 = vld [vmem:[#allocation2 + $0x78] sm:$0xff]
    %v284 = vld [vmem:[%s2] sm:$0x1]
    %v286 = vperm.slane %v284, 0
    %v288 = vadd.f32 %v268, %v286
    %v289 = vadd.f32 %v269, %v286
    %v290 = vadd.f32 %v270, %v286
    %v291 = vadd.f32 %v271, %v286
    %v292 = vadd.f32 %v272, %v286
    %v293 = vadd.f32 %v273, %v286
    %v294 = vadd.f32 %v274, %v286
    %v295 = vadd.f32 %v275, %v286
    %v296 = vadd.f32 %v276, %v286
    %v297 = vadd.f32 %v277, %v286
    %v298 = vadd.f32 %v278, %v286
    %v299 = vadd.f32 %v279, %v286
    %v300 = vadd.f32 %v280, %v286
    %v301 = vadd.f32 %v281, %v286
    %v302 = vadd.f32 %v282, %v286
    %v303 = vadd.f32 %v283, %v286
    %304 = vadd.xlane.f32.xlu0 %v288
    %v305 = vpop.xlane.xlu0 %304
    %306 = vadd.xlane.f32.xlu0 %v289
    %v307 = vpop.xlane.xlu0 %306
    %308 = vadd.xlane.f32.xlu0 %v290
    %v309 = vpop.xlane.xlu0 %308
    %310 = vadd.xlane.f32.xlu0 %v291
    %v311 = vpop.xlane.xlu0 %310
    %312 = vadd.xlane.f32.xlu0 %v292
    %v313 = vpop.xlane.xlu0 %312
    %314 = vadd.xlane.f32.xlu0 %v293
    %v315 = vpop.xlane.xlu0 %314
    %316 = vadd.xlane.f32.xlu0 %v294
    %v317 = vpop.xlane.xlu0 %316
    %318 = vadd.xlane.f32.xlu0 %v295
    %v319 = vpop.xlane.xlu0 %318
    %320 = vadd.xlane.f32.xlu0 %v296
    %v321 = vpop.xlane.xlu0 %320
    %322 = vadd.xlane.f32.xlu0 %v297
    %v323 = vpop.xlane.xlu0 %322
    %324 = vadd.xlane.f32.xlu0 %v298
    %v325 = vpop.xlane.xlu0 %324
    %326 = vadd.xlane.f32.xlu0 %v299
    %v327 = vpop.xlane.xlu0 %326
    %328 = vadd.xlane.f32.xlu0 %v300
    %v329 = vpop.xlane.xlu0 %328
    %330 = vadd.xlane.f32.xlu0 %v301
    %v331 = vpop.xlane.xlu0 %330
    %332 = vadd.xlane.f32.xlu0 %v302
    %v333 = vpop.xlane.xlu0 %332
    %334 = vadd.xlane.f32.xlu0 %v303
    %v335 = vpop.xlane.xlu0 %334
    %v336 = vmul.f32 %v305, 0.03125
    %v337 = vmul.f32 %v307, 0.03125
    %v338 = vmul.f32 %v309, 0.03125
    %v339 = vmul.f32 %v311, 0.03125
    %v340 = vmul.f32 %v313, 0.03125
    %v341 = vmul.f32 %v315, 0.03125
    %v342 = vmul.f32 %v317, 0.03125
    %v343 = vmul.f32 %v319, 0.03125
    %v344 = vmul.f32 %v321, 0.03125
    %v345 = vmul.f32 %v323, 0.03125
    %v346 = vmul.f32 %v325, 0.03125
    %v347 = vmul.f32 %v327, 0.03125
    %v348 = vmul.f32 %v329, 0.03125
    %v349 = vmul.f32 %v331, 0.03125
    %v350 = vmul.f32 %v333, 0.03125
    %v351 = vmul.f32 %v335, 0.03125
    %v352 = vlaneseq
    %v353 = vand.u32 %v352, 127
    %vm354 = vcmp.lt.s32.totalorder %v353, 32
    %v355 = vsel %vm354, 1, 0
    %v356 = vcvt.s32.f32 %v355
    %v357 = vsub.f32 %v288, %v336
    %v358 = vsub.f32 %v289, %v337
    %v359 = vsub.f32 %v290, %v338
    %v360 = vsub.f32 %v291, %v339
    %v361 = vsub.f32 %v292, %v340
    %v362 = vsub.f32 %v293, %v341
    %v363 = vsub.f32 %v294, %v342
    %v364 = vsub.f32 %v295, %v343
    %v365 = vsub.f32 %v296, %v344
    %v366 = vsub.f32 %v297, %v345
    %v367 = vsub.f32 %v298, %v346
    %v368 = vsub.f32 %v299, %v347
    %v369 = vsub.f32 %v300, %v348
    %v370 = vsub.f32 %v301, %v349
    %v371 = vsub.f32 %v302, %v350
    %v372 = vsub.f32 %v303, %v351
    %v373 = vmul.f32 %v357, %v356
    %v374 = vmul.f32 %v358, %v356
    %v375 = vmul.f32 %v359, %v356
    %v376 = vmul.f32 %v360, %v356
    %v377 = vmul.f32 %v361, %v356
    %v378 = vmul.f32 %v362, %v356
    %v379 = vmul.f32 %v363, %v356
    %v380 = vmul.f32 %v364, %v356
    %v381 = vmul.f32 %v365, %v356
    %v382 = vmul.f32 %v366, %v356
    %v383 = vmul.f32 %v367, %v356
    %v384 = vmul.f32 %v368, %v356
    %v385 = vmul.f32 %v369, %v356
    %v386 = vmul.f32 %v370, %v356
    %v387 = vmul.f32 %v371, %v356
    %v388 = vmul.f32 %v372, %v356
    %v389 = vmul.f32 %v373, %v373
    %v390 = vmul.f32 %v374, %v374
    %v391 = vmul.f32 %v375, %v375
    %v392 = vmul.f32 %v376, %v376
    %v393 = vmul.f32 %v377, %v377
    %v394 = vmul.f32 %v378, %v378
    %v395 = vmul.f32 %v379, %v379
    %v396 = vmul.f32 %v380, %v380
    %v397 = vmul.f32 %v381, %v381
    %v398 = vmul.f32 %v382, %v382
    %v399 = vmul.f32 %v383, %v383
    %v400 = vmul.f32 %v384, %v384
    %v401 = vmul.f32 %v385, %v385
    %v402 = vmul.f32 %v386, %v386
    %v403 = vmul.f32 %v387, %v387
    %v404 = vmul.f32 %v388, %v388
    %405 = vadd.xlane.f32.xlu0 %v389
    %v406 = vpop.xlane.xlu0 %405
    %407 = vadd.xlane.f32.xlu0 %v390
    %v408 = vpop.xlane.xlu0 %407
    %409 = vadd.xlane.f32.xlu0 %v391
    %v410 = vpop.xlane.xlu0 %409
    %411 = vadd.xlane.f32.xlu0 %v392
    %v412 = vpop.xlane.xlu0 %411
    %413 = vadd.xlane.f32.xlu0 %v393
    %v414 = vpop.xlane.xlu0 %413
    %415 = vadd.xlane.f32.xlu0 %v394
    %v416 = vpop.xlane.xlu0 %415
    %417 = vadd.xlane.f32.xlu0 %v395
    %v418 = vpop.xlane.xlu0 %417
    %419 = vadd.xlane.f32.xlu0 %v396
    %v420 = vpop.xlane.xlu0 %419
    %421 = vadd.xlane.f32.xlu0 %v397
    %v422 = vpop.xlane.xlu0 %421
    %423 = vadd.xlane.f32.xlu0 %v398
    %v424 = vpop.xlane.xlu0 %423
    %425 = vadd.xlane.f32.xlu0 %v399
    %v426 = vpop.xlane.xlu0 %425
    %427 = vadd.xlane.f32.xlu0 %v400
    %v428 = vpop.xlane.xlu0 %427
    %429 = vadd.xlane.f32.xlu0 %v401
    %v430 = vpop.xlane.xlu0 %429
    %431 = vadd.xlane.f32.xlu0 %v402
    %v432 = vpop.xlane.xlu0 %431
    %433 = vadd.xlane.f32.xlu0 %v403
    %v434 = vpop.xlane.xlu0 %433
    %435 = vadd.xlane.f32.xlu0 %v404
    %v436 = vpop.xlane.xlu0 %435
    %v437 = vmul.f32 %v406, 0.03125
    %v438 = vmul.f32 %v408, 0.03125
    %v439 = vmul.f32 %v410, 0.03125
    %v440 = vmul.f32 %v412, 0.03125
    %v441 = vmul.f32 %v414, 0.03125
    %v442 = vmul.f32 %v416, 0.03125
    %v443 = vmul.f32 %v418, 0.03125
    %v444 = vmul.f32 %v420, 0.03125
    %v445 = vmul.f32 %v422, 0.03125
    %v446 = vmul.f32 %v424, 0.03125
    %v447 = vmul.f32 %v426, 0.03125
    %v448 = vmul.f32 %v428, 0.03125
    %v449 = vmul.f32 %v430, 0.03125
    %v450 = vmul.f32 %v432, 0.03125
    %v451 = vmul.f32 %v434, 0.03125
    %v452 = vmul.f32 %v436, 0.03125
    %v453 = vadd.f32 %v437, 1e-05
    %v454 = vadd.f32 %v438, 1e-05
    %v455 = vadd.f32 %v439, 1e-05
    %v456 = vadd.f32 %v440, 1e-05
    %v457 = vadd.f32 %v441, 1e-05
    %v458 = vadd.f32 %v442, 1e-05
    %v459 = vadd.f32 %v443, 1e-05
    %v460 = vadd.f32 %v444, 1e-05
    %v461 = vadd.f32 %v445, 1e-05
    %v462 = vadd.f32 %v446, 1e-05
    %v463 = vadd.f32 %v447, 1e-05
    %v464 = vadd.f32 %v448, 1e-05
    %v465 = vadd.f32 %v449, 1e-05
    %v466 = vadd.f32 %v450, 1e-05
    %v467 = vadd.f32 %v451, 1e-05
    %v468 = vadd.f32 %v452, 1e-05
    %v469 = vrsqrt.pop %v453
    %v470 = vmul.f32 %v469, %v453
    %v471 = vmul.f32 %v470, %v469
    %v472 = vmul.f32 0.5, %v471
    %v473 = vsub.f32 1.5, %v472
    %v474 = vmul.f32 %v469, %v473
    %vm475 = vweird.f32 %v453
    %vm476 = vweird.f32 %v469
    %vm477 = vmor %vm475, %vm476
    %v478 = vsel %vm477, %v469, %v474
    %v479 = vrsqrt.pop %v454
    %v480 = vmul.f32 %v479, %v454
    %v481 = vmul.f32 %v480, %v479
    %v482 = vmul.f32 0.5, %v481
    %v483 = vsub.f32 1.5, %v482
    %v484 = vmul.f32 %v479, %v483
    %vm485 = vweird.f32 %v454
    %vm486 = vweird.f32 %v479
    %vm487 = vmor %vm485, %vm486
    %v488 = vsel %vm487, %v479, %v484
    %v489 = vrsqrt.pop %v455
    %v490 = vmul.f32 %v489, %v455
    %v491 = vmul.f32 %v490, %v489
    %v492 = vmul.f32 0.5, %v491
    %v493 = vsub.f32 1.5, %v492
    %v494 = vmul.f32 %v489, %v493
    %vm495 = vweird.f32 %v455
    %vm496 = vweird.f32 %v489
    %vm497 = vmor %vm495, %vm496
    %v498 = vsel %vm497, %v489, %v494
    %v499 = vrsqrt.pop %v456
    %v500 = vmul.f32 %v499, %v456
    %v501 = vmul.f32 %v500, %v499
    %v502 = vmul.f32 0.5, %v501
    %v503 = vsub.f32 1.5, %v502
    %v504 = vmul.f32 %v499, %v503
    %vm505 = vweird.f32 %v456
    %vm506 = vweird.f32 %v499
    %vm507 = vmor %vm505, %vm506
    %v508 = vsel %vm507, %v499, %v504
    %v509 = vrsqrt.pop %v457
    %v510 = vmul.f32 %v509, %v457
    %v511 = vmul.f32 %v510, %v509
    %v512 = vmul.f32 0.5, %v511
    %v513 = vsub.f32 1.5, %v512
    %v514 = vmul.f32 %v509, %v513
    %vm515 = vweird.f32 %v457
    %vm516 = vweird.f32 %v509
    %vm517 = vmor %vm515, %vm516
    %v518 = vsel %vm517, %v509, %v514
    %v519 = vrsqrt.pop %v458
    %v520 = vmul.f32 %v519, %v458
    %v521 = vmul.f32 %v520, %v519
    %v522 = vmul.f32 0.5, %v521
    %v523 = vsub.f32 1.5, %v522
    %v524 = vmul.f32 %v519, %v523
    %vm525 = vweird.f32 %v458
    %vm526 = vweird.f32 %v519
    %vm527 = vmor %vm525, %vm526
    %v528 = vsel %vm527, %v519, %v524
    %v529 = vrsqrt.pop %v459
    %v530 = vmul.f32 %v529, %v459
    %v531 = vmul.f32 %v530, %v529
    %v532 = vmul.f32 0.5, %v531
    %v533 = vsub.f32 1.5, %v532
    %v534 = vmul.f32 %v529, %v533
    %vm535 = vweird.f32 %v459
    %vm536 = vweird.f32 %v529
    %vm537 = vmor %vm535, %vm536
    %v538 = vsel %vm537, %v529, %v534
    %v539 = vrsqrt.pop %v460
    %v540 = vmul.f32 %v539, %v460
    %v541 = vmul.f32 %v540, %v539
    %v542 = vmul.f32 0.5, %v541
    %v543 = vsub.f32 1.5, %v542
    %v544 = vmul.f32 %v539, %v543
    %vm545 = vweird.f32 %v460
    %vm546 = vweird.f32 %v539
    %vm547 = vmor %vm545, %vm546
    %v548 = vsel %vm547, %v539, %v544
    %v549 = vrsqrt.pop %v461
    %v550 = vmul.f32 %v549, %v461
    %v551 = vmul.f32 %v550, %v549
    %v552 = vmul.f32 0.5, %v551
    %v553 = vsub.f32 1.5, %v552
    %v554 = vmul.f32 %v549, %v553
    %vm555 = vweird.f32 %v461
    %vm556 = vweird.f32 %v549
    %vm557 = vmor %vm555, %vm556
    %v558 = vsel %vm557, %v549, %v554
    %v559 = vrsqrt.pop %v462
    %v560 = vmul.f32 %v559, %v462
    %v561 = vmul.f32 %v560, %v559
    %v562 = vmul.f32 0.5, %v561
    %v563 = vsub.f32 1.5, %v562
    %v564 = vmul.f32 %v559, %v563
    %vm565 = vweird.f32 %v462
    %vm566 = vweird.f32 %v559
    %vm567 = vmor %vm565, %vm566
    %v568 = vsel %vm567, %v559, %v564
    %v569 = vrsqrt.pop %v463
    %v570 = vmul.f32 %v569, %v463
    %v571 = vmul.f32 %v570, %v569
    %v572 = vmul.f32 0.5, %v571
    %v573 = vsub.f32 1.5, %v572
    %v574 = vmul.f32 %v569, %v573
    %vm575 = vweird.f32 %v463
    %vm576 = vweird.f32 %v569
    %vm577 = vmor %vm575, %vm576
    %v578 = vsel %vm577, %v569, %v574
    %v579 = vrsqrt.pop %v464
    %v580 = vmul.f32 %v579, %v464
    %v581 = vmul.f32 %v580, %v579
    %v582 = vmul.f32 0.5, %v581
    %v583 = vsub.f32 1.5, %v582
    %v584 = vmul.f32 %v579, %v583
    %vm585 = vweird.f32 %v464
    %vm586 = vweird.f32 %v579
    %vm587 = vmor %vm585, %vm586
    %v588 = vsel %vm587, %v579, %v584
    %v589 = vrsqrt.pop %v465
    %v590 = vmul.f32 %v589, %v465
    %v591 = vmul.f32 %v590, %v589
    %v592 = vmul.f32 0.5, %v591
    %v593 = vsub.f32 1.5, %v592
    %v594 = vmul.f32 %v589, %v593
    %vm595 = vweird.f32 %v465
    %vm596 = vweird.f32 %v589
    %vm597 = vmor %vm595, %vm596
    %v598 = vsel %vm597, %v589, %v594
    %v599 = vrsqrt.pop %v466
    %v600 = vmul.f32 %v599, %v466
    %v601 = vmul.f32 %v600, %v599
    %v602 = vmul.f32 0.5, %v601
    %v603 = vsub.f32 1.5, %v602
    %v604 = vmul.f32 %v599, %v603
    %vm605 = vweird.f32 %v466
    %vm606 = vweird.f32 %v599
    %vm607 = vmor %vm605, %vm606
    %v608 = vsel %vm607, %v599, %v604
    %v609 = vrsqrt.pop %v467
    %v610 = vmul.f32 %v609, %v467
    %v611 = vmul.f32 %v610, %v609
    %v612 = vmul.f32 0.5, %v611
    %v613 = vsub.f32 1.5, %v612
    %v614 = vmul.f32 %v609, %v613
    %vm615 = vweird.f32 %v467
    %vm616 = vweird.f32 %v609
    %vm617 = vmor %vm615, %vm616
    %v618 = vsel %vm617, %v609, %v614
    %v619 = vrsqrt.pop %v468
    %v620 = vmul.f32 %v619, %v468
    %v621 = vmul.f32 %v620, %v619
    %v622 = vmul.f32 0.5, %v621
    %v623 = vsub.f32 1.5, %v622
    %v624 = vmul.f32 %v619, %v623
    %vm625 = vweird.f32 %v468
    %vm626 = vweird.f32 %v619
    %vm627 = vmor %vm625, %vm626
    %v628 = vsel %vm627, %v619, %v624
    %v629 = vmul.f32 %v373, %v478
    %v630 = vmul.f32 %v374, %v488
    %v631 = vmul.f32 %v375, %v498
    %v632 = vmul.f32 %v376, %v508
    %v633 = vmul.f32 %v377, %v518
    %v634 = vmul.f32 %v378, %v528
    %v635 = vmul.f32 %v379, %v538
    %v636 = vmul.f32 %v380, %v548
    %v637 = vmul.f32 %v381, %v558
    %v638 = vmul.f32 %v382, %v568
    %v639 = vmul.f32 %v383, %v578
    %v640 = vmul.f32 %v384, %v588
    %v641 = vmul.f32 %v385, %v598
    %v642 = vmul.f32 %v386, %v608
    %v643 = vmul.f32 %v387, %v618
    %v644 = vmul.f32 %v388, %v628
    %v645 = vld [vmem:[%s3] sm:$0x1]
    %v647 = vperm.slane %v645, 0
    %v649 = vmul.f32 %v629, %v647
    %v650 = vmul.f32 %v630, %v647
    %v651 = vmul.f32 %v631, %v647
    %v652 = vmul.f32 %v632, %v647
    %v653 = vmul.f32 %v633, %v647
    %v654 = vmul.f32 %v634, %v647
    %v655 = vmul.f32 %v635, %v647
    %v656 = vmul.f32 %v636, %v647
    %v657 = vmul.f32 %v637, %v647
    %v658 = vmul.f32 %v638, %v647
    %v659 = vmul.f32 %v639, %v647
    %v660 = vmul.f32 %v640, %v647
    %v661 = vmul.f32 %v641, %v647
    %v662 = vmul.f32 %v642, %v647
    %v663 = vmul.f32 %v643, %v647
    %v664 = vmul.f32 %v644, %v647
    %v665 = vld [vmem:[%s4] sm:$0x1]
    %v667 = vperm.slane %v665, 0
    %v669 = vadd.f32 %v649, %v667
    %v670 = vadd.f32 %v650, %v667
    %v671 = vadd.f32 %v651, %v667
    %v672 = vadd.f32 %v652, %v667
    %v673 = vadd.f32 %v653, %v667
    %v674 = vadd.f32 %v654, %v667
    %v675 = vadd.f32 %v655, %v667
    %v676 = vadd.f32 %v656, %v667
    %v677 = vadd.f32 %v657, %v667
    %v678 = vadd.f32 %v658, %v667
    %v679 = vadd.f32 %v659, %v667
    %v680 = vadd.f32 %v660, %v667
    %v681 = vadd.f32 %v661, %v667
    %v682 = vadd.f32 %v662, %v667
    %v683 = vadd.f32 %v663, %v667
    %v684 = vadd.f32 %v664, %v667
    %v685 = vmax.f32 %v669, 0.0
    %v686 = vmax.f32 %v670, 0.0
    %v687 = vmax.f32 %v671, 0.0
    %v688 = vmax.f32 %v672, 0.0
    %v689 = vmax.f32 %v673, 0.0
    %v690 = vmax.f32 %v674, 0.0
    %v691 = vmax.f32 %v675, 0.0
    %v692 = vmax.f32 %v676, 0.0
    %v693 = vmax.f32 %v677, 0.0
    %v694 = vmax.f32 %v678, 0.0
    %v695 = vmax.f32 %v679, 0.0
    %v696 = vmax.f32 %v680, 0.0
    %v697 = vmax.f32 %v681, 0.0
    %v698 = vmax.f32 %v682, 0.0
    %v699 = vmax.f32 %v683, 0.0
    %v700 = vmax.f32 %v684, 0.0
    %701 = vst [vmem:[%s5] sm:$0xff] %v685
    %702 = vst [vmem:[%s5 + $0x8] sm:$0xff] %v686
    %703 = vst [vmem:[%s5 + $0x10] sm:$0xff] %v687
    %704 = vst [vmem:[%s5 + $0x18] sm:$0xff] %v688
    %705 = vst [vmem:[%s5 + $0x20] sm:$0xff] %v689
    %706 = vst [vmem:[%s5 + $0x28] sm:$0xff] %v690
    %707 = vst [vmem:[%s5 + $0x30] sm:$0xff] %v691
    %708 = vst [vmem:[%s5 + $0x38] sm:$0xff] %v692
    %709 = vst [vmem:[%s5 + $0x40] sm:$0xff] %v693
    %710 = vst [vmem:[%s5 + $0x48] sm:$0xff] %v694
    %711 = vst [vmem:[%s5 + $0x50] sm:$0xff] %v695
    %712 = vst [vmem:[%s5 + $0x58] sm:$0xff] %v696
    %713 = vst [vmem:[%s5 + $0x60] sm:$0xff] %v697
    %714 = vst [vmem:[%s5 + $0x68] sm:$0xff] %v698
    %715 = vst [vmem:[%s5 + $0x70] sm:$0xff] %v699
    %716 = vst [vmem:[%s5 + $0x78] sm:$0xff] %v700
  $region29: #{gnn_forward.3} parent=0 // pred_fallthru
    _
  // Predicated region
  $region30: #{gnn_forward.3} parent=0 // pred_check
    _
  $region31: #{gnn_forward.3} parent=0 // pred_check_branch
    %718 = sbr.rel (0) target = $region33
  $region32: #{gnn_forward.3} parent=0 // pred_region
    _
  $region33: #{gnn_forward.3} parent=0 // pred_fallthru
    _
  // Predicated region
  $region34: #{gnn_forward.3} parent=0 // pred_check
    _
  $region35: #{gnn_forward.3} parent=0 // pred_check_branch
    %720 = sbr.rel (0) target = $region37
  $region36: #{gnn_forward.3} parent=0 // pred_region
    _
  $region37: #{gnn_forward.3} parent=0 // pred_fallthru
    _

</llo_original>
